<compile_context>
chip_gen: v7x
topology: tpu7x:2x2x1
jax: 0.10.0
libtpu: 0.0.40
codegen_flags: <defaults>
</compile_context>

<pallas_src>
import functools

import jax
import jax.numpy as jnp
from jax.experimental import pallas as pl
from jax.experimental.pallas import tpu as pltpu

_VMEM_LIMIT = 48 * 1024 * 1024  # fits v7x's 64 MiB physical VMEM with headroom


def _round_up(x, m):
    return (x + m - 1) // m * m


def _pad2(a, rows, cols):
    r, c = a.shape
    if r == rows and c == cols:
        return a
    return jnp.pad(a, ((0, rows - r), (0, cols - c)))


def _pad1(a, n):
    if a.shape[0] == n:
        return a
    return jnp.pad(a, (0, n - a.shape[0]))


# -----------------------------------------------------------------------------
# Fused tiled linear kernel: y = epilogue( LN?(x) @ w + b? )  [+residual] [l2]
# -----------------------------------------------------------------------------


def _make_linear_kernel(*, activation, has_bias, has_ln, has_res, l2_out,
                        ln_dim, ln_eps):
    def kernel(*refs):
        # refs = (x, w, [b], [ln_g, ln_b], [res], out, acc)
        idx = 0
        x_ref = refs[idx]; idx += 1
        w_ref = refs[idx]; idx += 1
        b_ref = None
        g_ref = None
        gb_ref = None
        r_ref = None
        if has_bias:
            b_ref = refs[idx]; idx += 1
        if has_ln:
            g_ref = refs[idx]; idx += 1
            gb_ref = refs[idx]; idx += 1
        if has_res:
            r_ref = refs[idx]; idx += 1
        o_ref = refs[-2]
        acc_ref = refs[-1]

        k_idx = pl.program_id(2)

        @pl.when(k_idx == 0)
        def _():
            acc_ref[...] = jnp.zeros_like(acc_ref)

        if has_ln:
            # LN stats in f32 over the true feature count (padded cols are zero).
            xf = x_ref[...].astype(jnp.float32)
            s1 = jnp.sum(xf, axis=-1, keepdims=True)
            s2 = jnp.sum(xf * xf, axis=-1, keepdims=True)
            mu = s1 / ln_dim
            var = s2 / ln_dim - mu * mu
            xf = (xf - mu) * jax.lax.rsqrt(var + ln_eps)
            xf = xf * g_ref[...].astype(jnp.float32) + gb_ref[...].astype(jnp.float32)
            x_in = xf.astype(x_ref.dtype)
        else:
            x_in = x_ref[...]  # no up-cast; MXU accumulates in f32 via preferred type

        acc_ref[...] += jnp.dot(x_in, w_ref[...], preferred_element_type=jnp.float32)

        @pl.when(k_idx == pl.num_programs(2) - 1)
        def _():
            y = acc_ref[...]
            if has_bias:
                y = y + b_ref[...].astype(jnp.float32)
            if activation == "gelu":
                # exact (erf-based) GELU, matching nn.GELU() default
                y = jax.nn.gelu(y, approximate=False)
            if has_res:
                y = y + r_ref[...].astype(jnp.float32)
            if l2_out:
                # matches F.normalize(dim=-1): x / max(||x||_2, 1e-12)
                nrm = jnp.sqrt(jnp.sum(y * y, axis=-1, keepdims=True))
                y = y / jnp.maximum(nrm, 1e-12)
            o_ref[...] = y.astype(o_ref.dtype)

    return kernel


def _pick_tile(full_rounded, force_full, candidates=(512, 384, 256)):
    if force_full or full_rounded <= candidates[0]:
        return full_rounded
    for t in candidates:
        if full_rounded % t == 0:
            return t
    return candidates[0]


def linear_op(x, w, b=None, *, activation=None, ln_g=None, ln_b=None,
              ln_eps=1e-5, residual=None, l2_normalize_out=False, tm=256):
    """y = epilogue( LayerNorm?(x) @ w + b ), with optional fused residual add,
    GELU and l2-normalization.  x: (M, K), w: (K, N), residual: (M, N)."""
    M, K = x.shape
    N = w.shape[1]
    has_bias = b is not None
    has_ln = ln_g is not None
    has_res = residual is not None

    Kr = _round_up(K, 128)
    Nr = _round_up(N, 128)
    tm = min(tm, _round_up(M, 8))
    tk = _pick_tile(Kr, force_full=has_ln)          # LN needs the whole row in-tile
    tn = _pick_tile(Nr, force_full=l2_normalize_out)  # l2 needs the whole row in-tile

    Mp = _round_up(M, tm)
    Kp = _round_up(Kr, tk)
    Np = _round_up(Nr, tn)
    gm, gn, gk = Mp // tm, Np // tn, Kp // tk

    xp = _pad2(x, Mp, Kp)
    wp = _pad2(w, Kp, Np)
    inputs = [xp, wp]
    in_specs = [
        pl.BlockSpec((tm, tk), lambda i, j, k: (i, k)),
        pl.BlockSpec((tk, tn), lambda i, j, k: (k, j)),
    ]
    if has_bias:
        inputs.append(_pad1(b, Np).reshape(1, Np))
        in_specs.append(pl.BlockSpec((1, tn), lambda i, j, k: (0, j)))
    if has_ln:
        inputs.append(_pad1(ln_g, Kp).reshape(1, Kp))
        inputs.append(_pad1(ln_b, Kp).reshape(1, Kp))
        in_specs.append(pl.BlockSpec((1, tk), lambda i, j, k: (0, k)))
        in_specs.append(pl.BlockSpec((1, tk), lambda i, j, k: (0, k)))
    if has_res:
        inputs.append(_pad2(residual, Mp, Np))
        in_specs.append(pl.BlockSpec((tm, tn), lambda i, j, k: (i, j)))

    kernel = _make_linear_kernel(
        activation=activation, has_bias=has_bias, has_ln=has_ln,
        has_res=has_res, l2_out=l2_normalize_out, ln_dim=K, ln_eps=ln_eps)

    out = pl.pallas_call(
        kernel,
        out_shape=jax.ShapeDtypeStruct((Mp, Np), x.dtype),
        grid=(gm, gn, gk),
        in_specs=in_specs,
        out_specs=pl.BlockSpec((tm, tn), lambda i, j, k: (i, j)),
        scratch_shapes=[pltpu.VMEM((tm, tn), jnp.float32)],
        compiler_params=pltpu.CompilerParams(
            dimension_semantics=("parallel", "parallel", "arbitrary"),
            vmem_limit_bytes=_VMEM_LIMIT),
    )(*inputs)
    return out[:M, :N]


# -----------------------------------------------------------------------------
# Standalone LayerNorm (only needed for the vision ln_pre, which feeds the
# residual stream and therefore cannot be fused into a following linear).
# -----------------------------------------------------------------------------


def _layer_norm_kernel(x_ref, g_ref, b_ref, o_ref, *, eps):
    x = x_ref[...].astype(jnp.float32)
    mu = jnp.mean(x, axis=-1, keepdims=True)
    var = jnp.mean((x - mu) ** 2, axis=-1, keepdims=True)
    y = (x - mu) * jax.lax.rsqrt(var + eps)
    y = y * g_ref[...].astype(jnp.float32) + b_ref[...].astype(jnp.float32)
    o_ref[...] = y.astype(o_ref.dtype)


def layer_norm(x, gamma, beta, eps=1e-5):
    orig_shape = x.shape
    D = orig_shape[-1]
    M = 1
    for d in orig_shape[:-1]:
        M *= d
    x2 = x.reshape(M, D)
    tm = min(512, _round_up(M, 8))
    Mp = _round_up(M, tm)
    xp = _pad2(x2, Mp, D)
    out = pl.pallas_call(
        functools.partial(_layer_norm_kernel, eps=eps),
        out_shape=jax.ShapeDtypeStruct((Mp, D), x.dtype),
        grid=(Mp // tm,),
        in_specs=[
            pl.BlockSpec((tm, D), lambda i: (i, 0)),
            pl.BlockSpec((1, D), lambda i: (0, 0)),
            pl.BlockSpec((1, D), lambda i: (0, 0)),
        ],
        out_specs=pl.BlockSpec((tm, D), lambda i: (i, 0)),
        compiler_params=pltpu.CompilerParams(
            dimension_semantics=("parallel",),
            vmem_limit_bytes=_VMEM_LIMIT),
    )(xp, gamma.reshape(1, D), beta.reshape(1, D))
    return out[:M].reshape(orig_shape)


# -----------------------------------------------------------------------------
# Multi-head attention: grid over batch; heads sliced with static slices inside
# the kernel; output stays lane-dense with the full width D on the last axis.
# -----------------------------------------------------------------------------


def _mha_kernel(qkv_ref, o_ref, *, heads, width, scale):
    dh = width // heads
    qkv = qkv_ref[0]  # (S, 3*width)
    outs = []
    for h in range(heads):
        q = qkv[:, h * dh:(h + 1) * dh] * scale
        k = qkv[:, width + h * dh: width + (h + 1) * dh]
        v = qkv[:, 2 * width + h * dh: 2 * width + (h + 1) * dh]
        s = jnp.dot(q, k.T, preferred_element_type=jnp.float32)
        s = s - jnp.max(s, axis=-1, keepdims=True)
        p = jnp.exp(s)
        p = p * pl.reciprocal(jnp.sum(p, axis=-1, keepdims=True), approx=True)
        o = jnp.dot(p.astype(v.dtype), v, preferred_element_type=jnp.float32)
        outs.append(o)
    o_ref[0] = jnp.concatenate(outs, axis=-1).astype(o_ref.dtype)


def multi_head_attention(qkv, heads):
    """qkv: (B, S, 3*width) -> (B, S, width); full-softmax attention (no mask)."""
    B, S, three_w = qkv.shape
    width = three_w // 3
    scale = (width // heads) ** -0.5
    return pl.pallas_call(
        functools.partial(_mha_kernel, heads=heads, width=width, scale=scale),
        out_shape=jax.ShapeDtypeStruct((B, S, width), qkv.dtype),
        grid=(B,),
        in_specs=[pl.BlockSpec((1, S, three_w), lambda b: (b, 0, 0))],
        out_specs=pl.BlockSpec((1, S, width), lambda b: (b, 0, 0)),
        compiler_params=pltpu.CompilerParams(
            dimension_semantics=("parallel",),
            vmem_limit_bytes=_VMEM_LIMIT),
    )(qkv)


# -----------------------------------------------------------------------------
# Transformer building blocks (glue around the kernels)
# -----------------------------------------------------------------------------


def residual_attention_block(x, blk, heads):
    """Pre-LN transformer block: x + MHA(LN(x)); x + MLP(LN(x)).
    LN1/LN2 are fused into the QKV / fc1 matmuls; residual adds are fused into
    the out-proj / fc2 matmul epilogues."""
    B, S, D = x.shape
    x2 = x.reshape(B * S, D)

    qkv = linear_op(x2, blk["w_qkv"], blk["b_qkv"],
                    ln_g=blk["ln1_g"], ln_b=blk["ln1_b"])          # LN1 fused
    attn = multi_head_attention(qkv.reshape(B, S, 3 * D), heads)    # (B, S, D)
    x2 = linear_op(attn.reshape(B * S, D), blk["w_out"], blk["b_out"],
                   residual=x2)                                      # +residual fused

    h = linear_op(x2, blk["w_fc1"], blk["b_fc1"],
                  ln_g=blk["ln2_g"], ln_b=blk["ln2_b"],
                  activation="gelu")                                 # LN2+GELU fused
    x2 = linear_op(h, blk["w_fc2"], blk["b_fc2"], residual=x2)       # +residual fused
    return x2.reshape(B, S, D)


def vision_tower(image, vp):
    """VisionTransformer forward: patch-embed -> +CLS -> +pos -> ln_pre -> blocks
    -> (ln_post fused) tok-pool -> proj (l2-normalize fused).
    embed_unc=False => std is None."""
    B, C, H, W = image.shape
    P = vp["patch_size"]
    nH, nW = H // P, W // P
    width = vp["width"]
    # conv(stride=P, kernel=P, bias=False) lowered to matmul over flattened patches
    patches = (
        image.reshape(B, C, nH, P, nW, P)
        .transpose(0, 2, 4, 1, 3, 5)
        .reshape(B * nH * nW, C * P * P)
    )
    x = linear_op(patches, vp["w_patch"])                 # no bias (conv bias=False)
    x = x.reshape(B, nH * nW, width)

    cls = jnp.broadcast_to(vp["cls_emb"], (B, 1, width))
    x = jnp.concatenate([cls, x], axis=1)                  # (B, N+1, width)
    x = x + vp["pos_emb"]
    x = layer_norm(x, vp["ln_pre_g"], vp["ln_pre_b"])
    for blk in vp["blocks"]:
        x = residual_attention_block(x, blk, vp["heads"])
    pooled = x[:, 0]                                       # pool_type='tok'
    # ln_post is per-token, so pooling first then fusing it into the projection
    # is mathematically identical; l2-normalize is fused into the same epilogue.
    mean = linear_op(pooled, vp["proj"],
                     ln_g=vp["ln_post_g"], ln_b=vp["ln_post_b"],
                     l2_normalize_out=True)                # proj has no bias
    return {"mean": mean, "std": None}


def text_tower(text, tp):
    """TextTransformer forward with ProLIP [CLS]+[UNC] tokens, no causal mask."""
    B, L = text.shape
    width = tp["width"]
    x = jnp.take(tp["token_emb"], text, axis=0)            # embedding gather (glue)
    cls = jnp.broadcast_to(tp["cls_emb"], (B, 1, width))
    unc = jnp.broadcast_to(tp["unc_emb"], (B, 1, width))
    x = jnp.concatenate([x, cls, unc], axis=1)             # (B, L+2, width)
    x = x + tp["pos_emb"][:, : L + 2]
    for blk in tp["blocks"]:
        x = residual_attention_block(x, blk, tp["heads"])
    pooled = x[:, -2]                                      # [CLS] token output
    unc_tok = x[:, -1]                                     # [UNC] token output
    # ln_final fused into both heads; l2-normalize fused into the mean head.
    mean = linear_op(pooled, tp["w_proj"], tp["b_proj"],
                     ln_g=tp["ln_final_g"], ln_b=tp["ln_final_b"],
                     l2_normalize_out=True)
    # TODO(synk): exact ProLIP uncertainty head not provided in prompt; modeled as a
    # linear head on the [UNC] token with bias initialized to init_unc_bias=-10.
    std = linear_op(unc_tok, tp["w_unc"], tp["b_unc"],
                    ln_g=tp["ln_final_g"], ln_b=tp["ln_final_b"])
    return {"mean": mean, "std": std}


def prolip_forward(image, text, params):
    image_features = vision_tower(image, params["visual"])   # mean already normalized
    text_features = text_tower(text, params["text"])         # mean already normalized
    return {
        "image_features": image_features,
        "text_features": text_features,
        "logit_scale": jnp.exp(params["logit_scale"]),
    }


# -----------------------------------------------------------------------------
# Deterministic parameter init (synthetic weights, not a checkpoint load)
# -----------------------------------------------------------------------------


def _randn(key, shape, scale=0.02):
    return scale * jax.random.normal(key, shape, dtype=jnp.float32)


def init_block(key, width, mlp_ratio=4):
    ks = jax.random.split(key, 4)
    hidden = width * mlp_ratio
    return {
        "ln1_g": jnp.ones((width,), jnp.float32),
        "ln1_b": jnp.zeros((width,), jnp.float32),
        "w_qkv": _randn(ks[0], (width, 3 * width)),
        "b_qkv": jnp.zeros((3 * width,), jnp.float32),
        "w_out": _randn(ks[1], (width, width)),
        "b_out": jnp.zeros((width,), jnp.float32),
        "ln2_g": jnp.ones((width,), jnp.float32),
        "ln2_b": jnp.zeros((width,), jnp.float32),
        "w_fc1": _randn(ks[2], (width, hidden)),
        "b_fc1": jnp.zeros((hidden,), jnp.float32),
        "w_fc2": _randn(ks[3], (hidden, width)),
        "b_fc2": jnp.zeros((width,), jnp.float32),
    }


def init_params(key, *, embed_dim, img_ch, image_size, patch_size, v_width, v_heads,
                v_layers, ctx_len, vocab_size, t_width, t_heads, t_layers,
                init_unc_bias=-10.0):
    keys = jax.random.split(key, 16)
    n_patches = (image_size // patch_size) ** 2
    visual = {
        "patch_size": patch_size,
        "width": v_width,
        "heads": v_heads,
        "w_patch": _randn(keys[0], (img_ch * patch_size * patch_size, v_width)),
        "cls_emb": _randn(keys[1], (1, 1, v_width)),
        "pos_emb": _randn(keys[2], (1, n_patches + 1, v_width)),
        "ln_pre_g": jnp.ones((v_width,), jnp.float32),
        "ln_pre_b": jnp.zeros((v_width,), jnp.float32),
        "ln_post_g": jnp.ones((v_width,), jnp.float32),
        "ln_post_b": jnp.zeros((v_width,), jnp.float32),
        "proj": _randn(keys[3], (v_width, embed_dim)),
        "blocks": [init_block(k, v_width) for k in jax.random.split(keys[4], v_layers)],
    }
    text = {
        "width": t_width,
        "heads": t_heads,
        "token_emb": _randn(keys[5], (vocab_size, t_width)),
        "cls_emb": _randn(keys[6], (1, 1, t_width)),
        "unc_emb": _randn(keys[7], (1, 1, t_width)),
        "pos_emb": _randn(keys[8], (1, ctx_len + 2, t_width)),
        "ln_final_g": jnp.ones((t_width,), jnp.float32),
        "ln_final_b": jnp.zeros((t_width,), jnp.float32),
        "w_proj": _randn(keys[9], (t_width, embed_dim)),
        "b_proj": jnp.zeros((embed_dim,), jnp.float32),
        "w_unc": _randn(keys[10], (t_width, embed_dim)),
        "b_unc": jnp.full((embed_dim,), init_unc_bias, jnp.float32),
        "blocks": [init_block(k, t_width) for k in jax.random.split(keys[11], t_layers)],
    }
    return {
        "visual": visual,
        "text": text,
        "logit_scale": jnp.asarray(jnp.log(1.0 / 0.07), jnp.float32),
        # init_logit_bias is None by default -> no logit_bias parameter
    }


# -----------------------------------------------------------------------------
# Main
# -----------------------------------------------------------------------------

if __name__ == "__main__":
    key = jax.random.PRNGKey(0)
    k_params, k_img, k_txt = jax.random.split(key, 3)

    # Small config consistent with the module's forward:
    embed_dim = 32
    B, C, IMG, PATCH = 2, 3, 16, 4          # vision: 16x16 image, 4x4 patches -> 16 tokens
    V_WIDTH, V_HEADS, V_LAYERS = 32, 4, 2   # head_width = 8
    CTX, VOCAB = 8, 64
    T_WIDTH, T_HEADS, T_LAYERS = 32, 4, 2

    params = init_params(
        k_params, embed_dim=embed_dim, img_ch=C, image_size=IMG, patch_size=PATCH,
        v_width=V_WIDTH, v_heads=V_HEADS, v_layers=V_LAYERS,
        ctx_len=CTX, vocab_size=VOCAB, t_width=T_WIDTH, t_heads=T_HEADS,
        t_layers=T_LAYERS, init_unc_bias=-10.0,
    )

    image = jax.random.normal(k_img, (B, C, IMG, IMG), dtype=jnp.float32)   # NCHW
    text = jax.random.randint(k_txt, (B, CTX), 1, VOCAB, dtype=jnp.int32)

    out = prolip_forward(image, text, params)

    jax.block_until_ready(out["image_features"]["mean"])
    jax.block_until_ready(out["text_features"]["mean"])
    jax.block_until_ready(out["text_features"]["std"])
    jax.block_until_ready(out["logit_scale"])

    assert out["image_features"]["mean"].shape == (B, embed_dim)
    assert out["image_features"]["std"] is None
    assert out["text_features"]["mean"].shape == (B, embed_dim)
    assert out["text_features"]["std"].shape == (B, embed_dim)
    print("KERNEL_OK")
</pallas_src>

<mosaic_0001>
module attributes {stable_mosaic.version = 11 : i64} {
  func.func @kernel(%arg0: i32, %arg1: i32, %arg2: i32, %arg3: memref<32x128xf32, #tpu.memory_space<vmem>>, %arg4: memref<128x128xf32, #tpu.memory_space<vmem>>, %arg5: memref<32x128xf32, #tpu.memory_space<vmem>>, %arg6: memref<32x128xf32, #tpu.memory_space<vmem>>) attributes {dimension_semantics = [#tpu.dimension_semantics<parallel>, #tpu.dimension_semantics<parallel>, #tpu.dimension_semantics<arbitrary>], iteration_bounds = array<i64: 1, 1, 1>, scalar_prefetch = 0 : i64, scratch_operands = 1 : i64, tpu.core_type = #tpu.core_type<tc>, window_params = [{transform_indices = @transform_0, window_bounds = array<i64: 32, 128>}, {transform_indices = @transform_1, window_bounds = array<i64: 128, 128>}, {transform_indices = @transform_2, window_bounds = array<i64: 32, 128>}]} {
    %c0_i32 = arith.constant 0 : i32
    %0 = arith.cmpi eq, %arg2, %c0_i32 : i32
    %1 = arith.extui %0 : i1 to i32
    %c0_i32_0 = arith.constant 0 : i32
    %2 = arith.cmpi ne, %1, %c0_i32_0 : i32
    scf.if %2 {
      %cst_10 = arith.constant 0.000000e+00 : f32
      %12 = vector.broadcast %cst_10 : f32 to vector<32x128xf32>
      %c0_11 = arith.constant 0 : index
      %c0_12 = arith.constant 0 : index
      %13 = vector.load %arg6[%c0_11, %c0_12] : memref<32x128xf32, #tpu.memory_space<vmem>>, vector<32x128xf32>
      tpu.vector_store %arg6[%c0_11, %c0_12], %12 {strides = array<i32>} : memref<32x128xf32, #tpu.memory_space<vmem>>, vector<32x128xf32>,
    } else {
    }
    %c0 = arith.constant 0 : index
    %c0_1 = arith.constant 0 : index
    %3 = vector.load %arg3[%c0, %c0_1] : memref<32x128xf32, #tpu.memory_space<vmem>>, vector<32x128xf32>
    %c0_2 = arith.constant 0 : index
    %c0_3 = arith.constant 0 : index
    %4 = vector.load %arg6[%c0_2, %c0_3] : memref<32x128xf32, #tpu.memory_space<vmem>>, vector<32x128xf32>
    %c0_4 = arith.constant 0 : index
    %c0_5 = arith.constant 0 : index
    %5 = vector.load %arg4[%c0_4, %c0_5] : memref<128x128xf32, #tpu.memory_space<vmem>>, vector<128x128xf32>
    %cst = arith.constant dense<0.000000e+00> : vector<32x128xf32>
    %6 = tpu.matmul %3, %5, %cst {dimension_numbers = #tpu.dot_dimension_numbers<[1], [0], [0], [1], [0, 0, 1, 1], [], []>} : vector<32x128xf32>, vector<128x128xf32>, vector<32x128xf32> -> vector<32x128xf32>
    %7 = arith.addf %4, %6 : vector<32x128xf32>
    %c0_6 = arith.constant 0 : index
    %c0_7 = arith.constant 0 : index
    %8 = vector.load %arg6[%c0_6, %c0_7] : memref<32x128xf32, #tpu.memory_space<vmem>>, vector<32x128xf32>
    tpu.vector_store %arg6[%c0_6, %c0_7], %7 {strides = array<i32>} : memref<32x128xf32, #tpu.memory_space<vmem>>, vector<32x128xf32>,
    %c0_i32_8 = arith.constant 0 : i32
    %9 = arith.cmpi eq, %arg2, %c0_i32_8 : i32
    %10 = arith.extui %9 : i1 to i32
    %c0_i32_9 = arith.constant 0 : i32
    %11 = arith.cmpi ne, %10, %c0_i32_9 : i32
    scf.if %11 {
      %c0_10 = arith.constant 0 : index
      %c0_11 = arith.constant 0 : index
      %12 = vector.load %arg6[%c0_10, %c0_11] : memref<32x128xf32, #tpu.memory_space<vmem>>, vector<32x128xf32>
      %c0_12 = arith.constant 0 : index
      %c0_13 = arith.constant 0 : index
      %13 = vector.load %arg5[%c0_12, %c0_13] : memref<32x128xf32, #tpu.memory_space<vmem>>, vector<32x128xf32>
      tpu.vector_store %arg5[%c0_12, %c0_13], %12 {strides = array<i32>} : memref<32x128xf32, #tpu.memory_space<vmem>>, vector<32x128xf32>,
    } else {
    }
    return
  }
  func.func @transform_0(%arg0: i32, %arg1: i32, %arg2: i32) -> (i32, i32) {
    %c0_i32 = arith.constant 0 : i32
    return %arg0, %arg2 : i32, i32
  }
  func.func @transform_1(%arg0: i32, %arg1: i32, %arg2: i32) -> (i32, i32) {
    %c0_i32 = arith.constant 0 : i32
    return %arg2, %arg1 : i32, i32
  }
  func.func @transform_2(%arg0: i32, %arg1: i32, %arg2: i32) -> (i32, i32) {
    %c0_i32 = arith.constant 0 : i32
    return %arg0, %arg1 : i32, i32
  }
}

</mosaic_0001>

<llo_original>
// kernel: tpu_custom_call.1
$region0: #{tpu_custom_call.1}
  #allocation0 [shape = 'u32[]', space=smem, size = 0x4, offset = 0x4, fixed_abs, tag = 'smem constant byte address 0x4 - core index']
  #allocation1 [shape = 'u32[144,128]{1,0:T(1,128)}', space=vmem, size = 0x12000, scoped, tag = 'internal scratch']
  #allocation2 [shape = 'f32[32,128]{1,0:T(8,128)}', space=vmem, size = 0x4000, scoped, tag = 'scratch operand']
  %s0 = inlined_call_operand.hbm [shape: f32[32,128], index: 0, kind: input, shape index: {}]
  %s1 = inlined_call_operand.hbm [shape: f32[128,128], index: 1, kind: input, shape index: {}]
  %s2 = inlined_call_operand.hbm [shape: f32[32,128], index: 2, kind: output, shape index: {}]
  %s3 = sld [smem:[#allocation0]]
  $region34: #{tpu_custom_call.1} parent=0
    _
  %s5 = ssub.s32 1, %s3
  %s6 = scalar_select 0, %s5, %s3
  $region1: #{tpu_custom_call.1} parent=0
    #allocation3 [shape = 'u8[16384]{0}', space=vmem, size = 0x4000, scoped, tag = 'input window, operand 0, single buffered']
    #allocation4 [shape = 's32[1]{0}', space=sflag, size = 0x4, scoped, tag = 'scoped memory for tpu_custom_call.1']
    #allocation5 [shape = 's32[1]{0}', space=sflag, size = 0x4, scoped, tag = 'scoped memory for tpu_custom_call.1']
    #allocation6 [shape = 'u8[65536]{0}', space=vmem, size = 0x10000, scoped, tag = 'input window, operand 1, single buffered']
    #allocation7 [shape = 's32[1]{0}', space=sflag, size = 0x4, scoped, tag = 'scoped memory for tpu_custom_call.1']
    #allocation8 [shape = 'u8[16384]{0}', space=vmem, size = 0x4000, scoped, tag = 'output window, operand 0, single buffered']
    %7 = vsyncpa [#allocation4], 0
    %8 = vsyncpa [#allocation7], 0
    %9 = vsyncpa [#allocation5], 0
    // Predicated region
    $region2: #{tpu_custom_call.1} parent=1 // pred_check
      _
    $region3: #{tpu_custom_call.1} parent=1 // pred_check_branch
      %11 = sbr.rel (0) target = $region5
    $region4: #{tpu_custom_call.1} parent=1 // pred_region
      %s13 = ssub.s32 512, 512
      %14 = vsyncadd [#allocation4], %s13
      %s15 = sshll.u32 [#allocation3], 4
      %s16 = int_to_ptr.vmem [resolvable:$true] %s15
      %21 = dma.hbm_to_vmem [thread:$0]  %s0, 512, %s16, [#allocation4], 128, 128, 8
    $region5: #{tpu_custom_call.1} parent=1 // pred_fallthru
      _
    // Predicated region
    $region6: #{tpu_custom_call.1} parent=1 // pred_check
      _
    $region7: #{tpu_custom_call.1} parent=1 // pred_check_branch
      %23 = sbr.rel (0) target = $region9
    $region8: #{tpu_custom_call.1} parent=1 // pred_region
      %s25 = ssub.s32 2048, 2048
      %26 = vsyncadd [#allocation7], %s25
      %s27 = sshll.u32 [#allocation6], 4
      %s28 = int_to_ptr.vmem [resolvable:$true] %s27
      %33 = dma.hbm_to_vmem [thread:$0]  %s1, 2048, %s28, [#allocation7], 128, 128, 8
    $region9: #{tpu_custom_call.1} parent=1 // pred_fallthru
      _
    // Predicated region
    $region10: #{tpu_custom_call.1} parent=1 // pred_check
      _
    $region11: #{tpu_custom_call.1} parent=1 // pred_check_branch
      %35 = sbr.rel (0) target = $region13
    $region12: #{tpu_custom_call.1} parent=1 // pred_region
      %36 = dma.done [#allocation4], 512
    $region13: #{tpu_custom_call.1} parent=1 // pred_fallthru
      _
    // Predicated region
    $region14: #{tpu_custom_call.1} parent=1 // pred_check
      _
    $region15: #{tpu_custom_call.1} parent=1 // pred_check_branch
      %38 = sbr.rel (0) target = $region17
    $region16: #{tpu_custom_call.1} parent=1 // pred_region
      %39 = dma.done [#allocation7], 2048
    $region17: #{tpu_custom_call.1} parent=1 // pred_fallthru
      _
    %p40 = scmp.eq.s32.totalorder 0, 0
    // Predicated region
    $region18: #{tpu_custom_call.1} parent=1 // pred_check
      %p41 = pneg %p40
    $region19: #{tpu_custom_call.1} parent=1 // pred_check_branch
      %43 = sbr.rel (%p41) target = $region21
    $region20: #{tpu_custom_call.1} parent=1 // pred_region
      %44 = vst [vmem:[#allocation2] sm:$0xff] 0.0
      %45 = vst [vmem:[#allocation2 + $0x8] sm:$0xff] 0.0
      %46 = vst [vmem:[#allocation2 + $0x10] sm:$0xff] 0.0
      %47 = vst [vmem:[#allocation2 + $0x18] sm:$0xff] 0.0
    $region21: #{tpu_custom_call.1} parent=1 // pred_fallthru
      _
    %v48 = vld [vmem:[#allocation3] sm:$0xff]
    %v49 = vld [vmem:[#allocation3 + $0x8] sm:$0xff]
    %v50 = vld [vmem:[#allocation3 + $0x10] sm:$0xff]
    %v51 = vld [vmem:[#allocation3 + $0x18] sm:$0xff]
    %v52 = vld [vmem:[#allocation2] sm:$0xff]
    %v53 = vld [vmem:[#allocation2 + $0x8] sm:$0xff]
    %v54 = vld [vmem:[#allocation2 + $0x10] sm:$0xff]
    %v55 = vld [vmem:[#allocation2 + $0x18] sm:$0xff]
    %v56 = vld [vmem:[#allocation6] sm:$0xff]
    %v57 = vld [vmem:[#allocation6 + $0x8] sm:$0xff]
    %v58 = vld [vmem:[#allocation6 + $0x10] sm:$0xff]
    %v59 = vld [vmem:[#allocation6 + $0x18] sm:$0xff]
    %v60 = vld [vmem:[#allocation6 + $0x20] sm:$0xff]
    %v61 = vld [vmem:[#allocation6 + $0x28] sm:$0xff]
    %v62 = vld [vmem:[#allocation6 + $0x30] sm:$0xff]
    %v63 = vld [vmem:[#allocation6 + $0x38] sm:$0xff]
    %v64 = vld [vmem:[#allocation6 + $0x40] sm:$0xff]
    %v65 = vld [vmem:[#allocation6 + $0x48] sm:$0xff]
    %v66 = vld [vmem:[#allocation6 + $0x50] sm:$0xff]
    %v67 = vld [vmem:[#allocation6 + $0x58] sm:$0xff]
    %v68 = vld [vmem:[#allocation6 + $0x60] sm:$0xff]
    %v69 = vld [vmem:[#allocation6 + $0x68] sm:$0xff]
    %v70 = vld [vmem:[#allocation6 + $0x70] sm:$0xff]
    %v71 = vld [vmem:[#allocation6 + $0x78] sm:$0xff]
    %72 = vmatprep.subr.mxu0 0.0
    %73 = vmatpush1.msra.mxu0 %v56
    %74 = vmatprep.subr.mxu0 0.0
    %75 = vmatpush1.msra.mxu0 %v57
    %76 = vmatprep.subr.mxu0 0.0
    %77 = vmatpush1.msra.mxu0 %v58
    %78 = vmatprep.subr.mxu0 0.0
    %79 = vmatpush1.msra.mxu0 %v59
    %80 = vmatprep.subr.mxu0 0.0
    %81 = vmatpush1.msra.mxu0 %v60
    %82 = vmatprep.subr.mxu0 0.0
    %83 = vmatpush1.msra.mxu0 %v61
    %84 = vmatprep.subr.mxu0 0.0
    %85 = vmatpush1.msra.mxu0 %v62
    %86 = vmatprep.subr.mxu0 0.0
    %87 = vmatpush1.msra.mxu0 %v63
    %88 = vmatprep.subr.mxu0 0.0
    %89 = vmatpush1.msra.mxu0 %v64
    %90 = vmatprep.subr.mxu0 0.0
    %91 = vmatpush1.msra.mxu0 %v65
    %92 = vmatprep.subr.mxu0 0.0
    %93 = vmatpush1.msra.mxu0 %v66
    %94 = vmatprep.subr.mxu0 0.0
    %95 = vmatpush1.msra.mxu0 %v67
    %96 = vmatprep.subr.mxu0 0.0
    %97 = vmatpush1.msra.mxu0 %v68
    %98 = vmatprep.subr.mxu0 0.0
    %99 = vmatpush1.msra.mxu0 %v69
    %100 = vmatprep.subr.mxu0 0.0
    %101 = vmatpush1.msra.mxu0 %v70
    %102 = vmatprep.subr.mxu0 0.0
    %103 = vmatpush1.msra.mxu0 %v71
    %104 = vmatprep.subr.mxu0 0.0
    %105 = vmatpush1.msra.mxu0 0.0
    %106 = vmatprep.subr.mxu0 0.0
    %107 = vmatpush1.msra.mxu0 0.0
    %108 = vmatprep.subr.mxu0 0.0
    %109 = vmatpush1.msra.mxu0 0.0
    %110 = vmatprep.subr.mxu0 0.0
    %111 = vmatpush1.msra.mxu0 0.0
    %112 = vmatprep.subr.mxu0 0.0
    %113 = vmatpush1.msra.mxu0 0.0
    %114 = vmatprep.subr.mxu0 0.0
    %115 = vmatpush1.msra.mxu0 0.0
    %116 = vmatprep.subr.mxu0 0.0
    %117 = vmatpush1.msra.mxu0 0.0
    %118 = vmatprep.subr.mxu0 0.0
    %119 = vmatpush1.msra.mxu0 0.0
    %120 = vmatprep.subr.mxu0 0.0
    %121 = vmatpush1.msra.mxu0 0.0
    %122 = vmatprep.subr.mxu0 0.0
    %123 = vmatpush1.msra.mxu0 0.0
    %124 = vmatprep.subr.mxu0 0.0
    %125 = vmatpush1.msra.mxu0 0.0
    %126 = vmatprep.subr.mxu0 0.0
    %127 = vmatpush1.msra.mxu0 0.0
    %128 = vmatprep.subr.mxu0 0.0
    %129 = vmatpush1.msra.mxu0 0.0
    %130 = vmatprep.subr.mxu0 0.0
    %131 = vmatpush1.msra.mxu0 0.0
    %132 = vmatprep.subr.mxu0 0.0
    %133 = vmatpush1.msra.mxu0 0.0
    %134 = vmatprep.subr.mxu0 0.0
    %135 = vmatpush1.msra.mxu0 0.0
    %136 = vmatprep.mubr.f32.mxu0 0.0
    %137 = vmatmul.mubr.f32.gmra.mrb[0].mxu0 %v48
    %v138 = vpop.f32.mrb[0].mxu0
    %v139 = vadd.f32 0.0, %v138
    %v140 = vpop.f32.mrb[0].mxu0
    %141 = vmatprep.mubr.f32.mxu0 0.0
    %142 = vmatmul.mubr.f32.gmra.mrb[0].mxu0 %v49
    %v143 = vpop.f32.mrb[0].mxu0
    %v144 = vadd.f32 0.0, %v143
    %v145 = vpop.f32.mrb[0].mxu0
    %146 = vmatprep.mubr.f32.mxu0 0.0
    %147 = vmatmul.mubr.f32.gmra.mrb[0].mxu0 %v50
    %v148 = vpop.f32.mrb[0].mxu0
    %v149 = vadd.f32 0.0, %v148
    %v150 = vpop.f32.mrb[0].mxu0
    %151 = vmatprep.mubr.f32.mxu0 0.0
    %152 = vmatmul.mubr.f32.gmra.mrb[0].mxu0 %v51
    %v153 = vpop.f32.mrb[0].mxu0
    %v154 = vadd.f32 0.0, %v153
    %v155 = vpop.f32.mrb[0].mxu0
    %156 = vdwg.mxu0
    %v157 = vadd.f32 %v52, %v139
    %v158 = vadd.f32 %v53, %v144
    %v159 = vadd.f32 %v54, %v149
    %v160 = vadd.f32 %v55, %v154
    %161 = vst [vmem:[#allocation2] sm:$0xff] %v157
    %162 = vst [vmem:[#allocation2 + $0x8] sm:$0xff] %v158
    %163 = vst [vmem:[#allocation2 + $0x10] sm:$0xff] %v159
    %164 = vst [vmem:[#allocation2 + $0x18] sm:$0xff] %v160
    // Predicated region
    $region22: #{tpu_custom_call.1} parent=1 // pred_check
      %p165 = pneg %p40
    $region23: #{tpu_custom_call.1} parent=1 // pred_check_branch
      %167 = sbr.rel (%p165) target = $region25
    $region24: #{tpu_custom_call.1} parent=1 // pred_region
      %v168 = vld [vmem:[#allocation2] sm:$0xff]
      %v169 = vld [vmem:[#allocation2 + $0x8] sm:$0xff]
      %v170 = vld [vmem:[#allocation2 + $0x10] sm:$0xff]
      %v171 = vld [vmem:[#allocation2 + $0x18] sm:$0xff]
      %172 = vst [vmem:[#allocation8] sm:$0xff] %v168
      %173 = vst [vmem:[#allocation8 + $0x8] sm:$0xff] %v169
      %174 = vst [vmem:[#allocation8 + $0x10] sm:$0xff] %v170
      %175 = vst [vmem:[#allocation8 + $0x18] sm:$0xff] %v171
    $region25: #{tpu_custom_call.1} parent=1 // pred_fallthru
      _
    // Predicated region
    $region26: #{tpu_custom_call.1} parent=1 // pred_check
      _
    $region27: #{tpu_custom_call.1} parent=1 // pred_check_branch
      %177 = sbr.rel (0) target = $region29
    $region28: #{tpu_custom_call.1} parent=1 // pred_region
      %s179 = ssub.s32 512, 512
      %180 = vsyncadd [#allocation5], %s179
      %s181 = sshll.u32 [#allocation8], 4
      %s182 = int_to_ptr.vmem [resolvable:$true] %s181
      %187 = dma.vmem_to_hbm [thread:$0]  %s182, 512, %s2, [#allocation5], 128, 128, 8
    $region29: #{tpu_custom_call.1} parent=1 // pred_fallthru
      _
    // Predicated region
    $region30: #{tpu_custom_call.1} parent=1 // pred_check
      _
    $region31: #{tpu_custom_call.1} parent=1 // pred_check_branch
      %189 = sbr.rel (0) target = $region33
    $region32: #{tpu_custom_call.1} parent=1 // pred_region
      %190 = dma.done [#allocation5], 512
    $region33: #{tpu_custom_call.1} parent=1 // pred_fallthru
      _
    %191 = vsyncpa [#allocation4], 1
    %192 = vsyncpa [#allocation7], 1
    %193 = vsyncpa [#allocation5], 1

</llo_original>
